<compile_context>
chip_gen: v5e
topology: v5e:2x2
jax: 0.10.0
libtpu: 0.0.40
codegen_flags: <defaults>
</compile_context>

<pallas_src>
import jax
import jax.numpy as jnp
from jax.experimental import pallas as pl
from jax.experimental.pallas import tpu as pltpu


def _linear_kernel(x_ref, w_ref, b_ref, o_ref):
    # x_ref: (TB, D), w_ref: (D, O), b_ref: (1, O)  ->  o_ref: (TB, O)
    acc = jnp.dot(x_ref[...], w_ref[...], preferred_element_type=jnp.float32)
    # Bias add is a VPU op hidden under the MXU/DMA; bias block is resident.
    o_ref[...] = (acc + b_ref[...]).astype(o_ref.dtype)


def logistic_regression_forward(x, weight, bias, *, block_b=2048):
    """x: (B, D) f32, weight: (O, D) f32 (PyTorch layout), bias: (O,) f32."""
    B, D = x.shape
    O = weight.shape[0]

    # One-time tiny transpose of the weight (O*D elements) -> (D, O) so the
    # kernel maps directly onto the MXU push with no per-step layout work.
    w_t = weight.T                      # (D, O)
    b_row = bias.reshape(1, O)          # (1, O)

    # Batch tile: multiple of 8 sublanes, capped by a VMEM budget so that the
    # double-buffered x (TB, D) + out (TB, O) f32 tiles stay well under the
    # 16 MiB scoped-VMEM default on v5e (plenty of headroom on v6e/v7x).
    budget_bytes = 12 * 1024 * 1024
    bytes_per_row = 4 * (D + O)                      # f32 x row + out row
    max_tb = max(8, (budget_bytes // (2 * bytes_per_row)) // 8 * 8)
    b_rounded = pl.cdiv(B, 8) * 8
    TB = max(8, min(block_b, max_tb, b_rounded))

    grid = (pl.cdiv(B, TB),)            # ragged last block handled by Pallas

    cost = pl.CostEstimate(
        flops=2 * B * D * O,
        transcendentals=0,
        bytes_accessed=4 * (B * D + D * O + O + B * O),
    )

    out = pl.pallas_call(
        _linear_kernel,
        out_shape=jax.ShapeDtypeStruct((B, O), x.dtype),
        grid_spec=pltpu.PrefetchScalarGridSpec(
            num_scalar_prefetch=0,
            grid=grid,
            in_specs=[
                pl.BlockSpec((TB, D), lambda i: (i, 0)),   # streamed batch tiles
                pl.BlockSpec((D, O), lambda i: (0, 0)),    # resident weight (D, O)
                pl.BlockSpec((1, O), lambda i: (0, 0)),    # resident bias
            ],
            out_specs=pl.BlockSpec((TB, O), lambda i: (i, 0)),
        ),
        compiler_params=pltpu.CompilerParams(
            dimension_semantics=("parallel",),  # shard batch tiles across TCs on v7x
        ),
        cost_estimate=cost,
    )(x, w_t, b_row)

    return out


if __name__ == "__main__":
    batch, input_dim, output_dim = 8, 32, 16

    key = jax.random.PRNGKey(0)
    kx, kw, kb = jax.random.split(key, 3)

    # Deterministic "parameters" (nn.Linear-shaped): weight (O, D), bias (O,)
    bound = 1.0 / jnp.sqrt(input_dim)
    weight = jax.random.uniform(kw, (output_dim, input_dim),
                                minval=-bound, maxval=bound, dtype=jnp.float32)
    bias = jax.random.uniform(kb, (output_dim,),
                              minval=-bound, maxval=bound, dtype=jnp.float32)
    x = jax.random.normal(kx, (batch, input_dim), dtype=jnp.float32)

    out = logistic_regression_forward(x, weight, bias)
    out = jax.block_until_ready(out)

    # Sanity check against plain-JAX reference.
    ref = x @ weight.T + bias
    assert out.shape == (batch, output_dim)
    assert jnp.allclose(out, ref, atol=1e-5, rtol=1e-5)

    print("KERNEL_OK")
</pallas_src>

<mosaic_0001>
module attributes {stable_mosaic.version = 11 : i64} {
  func.func @_linear_kernel(%arg0: i32, %arg1: memref<8x32xf32, #tpu.memory_space<vmem>>, %arg2: memref<32x16xf32, #tpu.memory_space<vmem>>, %arg3: memref<1x16xf32, #tpu.memory_space<vmem>>, %arg4: memref<8x16xf32, #tpu.memory_space<vmem>>) attributes {dimension_semantics = [#tpu.dimension_semantics<parallel>], iteration_bounds = array<i64: 1>, scalar_prefetch = 0 : i64, scratch_operands = 0 : i64, tpu.core_type = #tpu.core_type<tc>, window_params = [{transform_indices = @transform_0, window_bounds = array<i64: 8, 32>}, {pipeline_mode = #tpu.pipeline_mode<synchronous>, transform_indices = @transform_1, window_bounds = array<i64: 32, 16>}, {pipeline_mode = #tpu.pipeline_mode<synchronous>, transform_indices = @transform_2, window_bounds = array<i64: 1, 16>}, {transform_indices = @transform_3, window_bounds = array<i64: 8, 16>}]} {
    %c0 = arith.constant 0 : index
    %c0_0 = arith.constant 0 : index
    %0 = vector.load %arg1[%c0, %c0_0] : memref<8x32xf32, #tpu.memory_space<vmem>>, vector<8x32xf32>
    %c0_1 = arith.constant 0 : index
    %c0_2 = arith.constant 0 : index
    %1 = vector.load %arg2[%c0_1, %c0_2] : memref<32x16xf32, #tpu.memory_space<vmem>>, vector<32x16xf32>
    %cst = arith.constant dense<0.000000e+00> : vector<8x16xf32>
    %2 = tpu.matmul %0, %1, %cst {dimension_numbers = #tpu.dot_dimension_numbers<[1], [0], [0], [1], [0, 0, 1, 1], [], []>} : vector<8x32xf32>, vector<32x16xf32>, vector<8x16xf32> -> vector<8x16xf32>
    %c0_3 = arith.constant 0 : index
    %c0_4 = arith.constant 0 : index
    %3 = vector.load %arg3[%c0_3, %c0_4] : memref<1x16xf32, #tpu.memory_space<vmem>>, vector<1x16xf32>
    %4 = vector.broadcast %3 : vector<1x16xf32> to vector<8x16xf32>
    %5 = arith.addf %2, %4 : vector<8x16xf32>
    %c0_5 = arith.constant 0 : index
    %c0_6 = arith.constant 0 : index
    %6 = vector.load %arg4[%c0_5, %c0_6] : memref<8x16xf32, #tpu.memory_space<vmem>>, vector<8x16xf32>
    tpu.vector_store %arg4[%c0_5, %c0_6], %5 {strides = array<i32>} : memref<8x16xf32, #tpu.memory_space<vmem>>, vector<8x16xf32>,
    return
  }
  func.func @transform_0(%arg0: i32) -> (i32, i32) {
    %c0_i32 = arith.constant 0 : i32
    %c0_i32_0 = arith.constant 0 : i32
    return %arg0, %c0_i32 : i32, i32
  }
  func.func @transform_1(%arg0: i32) -> (i32, i32) {
    %c0_i32 = arith.constant 0 : i32
    %c0_i32_0 = arith.constant 0 : i32
    %c0_i32_1 = arith.constant 0 : i32
    return %c0_i32, %c0_i32_0 : i32, i32
  }
  func.func @transform_2(%arg0: i32) -> (i32, i32) {
    %c0_i32 = arith.constant 0 : i32
    %c0_i32_0 = arith.constant 0 : i32
    %c0_i32_1 = arith.constant 0 : i32
    return %c0_i32, %c0_i32_0 : i32, i32
  }
  func.func @transform_3(%arg0: i32) -> (i32, i32) {
    %c0_i32 = arith.constant 0 : i32
    %c0_i32_0 = arith.constant 0 : i32
    return %arg0, %c0_i32 : i32, i32
  }
}

</mosaic_0001>

<llo_original>
// kernel: tpu_custom_call.1
$region0: #{tpu_custom_call.1}
  #allocation0 [shape = 'u32[]', space=smem, size = 0x4, offset = 0x4, fixed_abs, tag = 'smem constant byte address 0x4 - core index']
  #allocation1 [shape = 'u32[72,128]{1,0:T(1,128)}', space=vmem, size = 0x9000, scoped, tag = 'internal scratch']
  %s0 = inlined_call_operand.vmem [shape: f32[8,32], index: 0, kind: input, shape index: {}]
  %s1 = inlined_call_operand.vmem [shape: f32[32,16], index: 1, kind: input, shape index: {}]
  %s2 = inlined_call_operand.vmem [shape: f32[1,16], index: 2, kind: input, shape index: {}]
  %s3 = inlined_call_operand.hbm [shape: f32[8,16], index: 3, kind: output, shape index: {}]
  %s4 = sld [smem:[#allocation0]]
  $region22: #{tpu_custom_call.1} parent=0
    _
  %s6 = ssub.s32 1, %s4
  %s7 = scalar_select 0, %s6, %s4
  $region1: #{tpu_custom_call.1} parent=0
    #allocation2 [shape = 'u8[4096]{0}', space=vmem, size = 0x1000, scoped, tag = 'output window, operand 0, single buffered']
    #allocation3 [shape = 's32[1]{0}', space=sflag, size = 0x4, scoped, tag = 'scoped memory for tpu_custom_call.1']
    %8 = vsyncpa [#allocation3], 0
    // Predicated region
    $region2: #{tpu_custom_call.1} parent=1 // pred_check
      _
    $region3: #{tpu_custom_call.1} parent=1 // pred_check_branch
      %10 = sbr.rel (0) target = $region5
    $region4: #{tpu_custom_call.1} parent=1 // pred_region
      _
    $region5: #{tpu_custom_call.1} parent=1 // pred_fallthru
      _
    // Predicated region
    $region6: #{tpu_custom_call.1} parent=1 // pred_check
      _
    $region7: #{tpu_custom_call.1} parent=1 // pred_check_branch
      %12 = sbr.rel (0) target = $region9
    $region8: #{tpu_custom_call.1} parent=1 // pred_region
      _
    $region9: #{tpu_custom_call.1} parent=1 // pred_fallthru
      _
    // Predicated region
    $region10: #{tpu_custom_call.1} parent=1 // pred_check
      _
    $region11: #{tpu_custom_call.1} parent=1 // pred_check_branch
      %14 = sbr.rel (0) target = $region13
    $region12: #{tpu_custom_call.1} parent=1 // pred_region
      _
    $region13: #{tpu_custom_call.1} parent=1 // pred_fallthru
      _
    %v15 = vld [vmem:[%s0] sm:$0xff]
    %v16 = vld [vmem:[%s1] sm:$0xff]
    %v17 = vld [vmem:[%s1 + $0x8] sm:$0xff]
    %v18 = vld [vmem:[%s1 + $0x10] sm:$0xff]
    %v19 = vld [vmem:[%s1 + $0x18] sm:$0xff]
    %v20 = vld [vmem:[%s2] sm:$0x1]
    %v22 = vperm.slane %v20, 0
    %vm24 = vcmask 261120
    %v26 = vsel %vm24, %v15, 0
    %28 = vmatpush.msra.mxu0 0.0
    %29 = vmatpush.msra.mxu0 0.0
    %30 = vmatpush.msra.mxu0 0.0
    %31 = vmatpush.msra.mxu0 0.0
    %32 = vmatpush.msra.mxu0 0.0
    %33 = vmatpush.msra.mxu0 0.0
    %34 = vmatpush.msra.mxu0 0.0
    %35 = vmatpush.msra.mxu0 0.0
    %36 = vmatpush.msra.mxu0 0.0
    %37 = vmatpush.msra.mxu0 0.0
    %38 = vmatpush.msra.mxu0 0.0
    %39 = vmatpush.msra.mxu0 0.0
    %40 = vmatpush.msra.mxu0 %v19
    %41 = vmatpush.msra.mxu0 %v18
    %42 = vmatpush.msra.mxu0 %v17
    %43 = vmatpush.msra.mxu0 %v16
    %44 = vmatmul.f32.gmra.mxu0 %v26
    %v45 = vpop.f32.mrf.mxu0
    %v46 = vadd.f32 %v22, %v45
    %47 = vdwg.mxu0
    %vm48 = vcmask 130048
    %49 = vst.msk [vmem:[#allocation2] sm:$0xff] %vm48, %v46
    // Predicated region
    $region14: #{tpu_custom_call.1} parent=1 // pred_check
      _
    $region15: #{tpu_custom_call.1} parent=1 // pred_check_branch
      %51 = sbr.rel (0) target = $region17
    $region16: #{tpu_custom_call.1} parent=1 // pred_region
      %53 = vsyncadd [#allocation3], 0
      %s55 = sshll.u32 [#allocation2], 4
      %s56 = int_to_ptr.vmem [resolvable:$true] %s55
      %s57 = sshll.u32 %s3, 4
      %s58 = int_to_ptr.hbm [resolvable:$true] %s57
      %60 = dma.vmem_to_hbm [thread:$0]  %s56, 128, %s58, [#allocation3]
    $region17: #{tpu_custom_call.1} parent=1 // pred_fallthru
      _
    // Predicated region
    $region18: #{tpu_custom_call.1} parent=1 // pred_check
      _
    $region19: #{tpu_custom_call.1} parent=1 // pred_check_branch
      %62 = sbr.rel (0) target = $region21
    $region20: #{tpu_custom_call.1} parent=1 // pred_region
      %64 = dma.done [#allocation3], 128
    $region21: #{tpu_custom_call.1} parent=1 // pred_fallthru
      _
    %65 = vsyncpa [#allocation3], 1

</llo_original>
